<compile_context>
chip_gen: v7x
topology: tpu7x:2x2x1
jax: 0.10.0
libtpu: 0.0.40
codegen_flags: <defaults>
</compile_context>

<pallas_src>
import functools
import math

import jax
import jax.numpy as jnp
from jax.experimental import pallas as pl
from jax.experimental.pallas import tpu as pltpu

H1, H2, H3, H_OUT = 256, 128, 64, 1


def _round_up(x, m):
    return ((x + m - 1) // m) * m


def _default_block_b():
    """Generation-aware batch-tile cap (sweepable)."""
    try:
        kind = jax.devices()[0].device_kind.lower()
    except Exception:
        return 2048
    if "v5 lite" in kind or "v5e" in kind or "v5litepod" in kind:
        # v5e MXU is ~4.7x slower; tb~2048 already amortizes per-step overhead
        # and keeps VMEM/warm-up small.
        return 2048
    # v6e / v7x (and newer): larger tile amortizes the fixed per-step cost;
    # ~11 MB of intermediates at 4096 stays well under v7x's 64 MiB VMEM.
    return 4096


def mlp_kernel(x_ref, w1_ref, b1_ref, w2_ref, b2_ref, w3_ref, b3_ref,
               w4_ref, b4_ref, o_ref):
    bf16 = jnp.bfloat16
    # Layer 1: Linear(D, 256) + ReLU (+ Dropout as identity).
    # Bias-add / ReLU / bf16-cast fused into one expression so only the bf16
    # copy of the hidden activation is materialized in VMEM.
    h = jnp.maximum(
        jnp.dot(x_ref[...], w1_ref[...], preferred_element_type=jnp.float32)
        + b1_ref[...], 0.0).astype(bf16)
    # Layer 2: Linear(256, 128) + ReLU (+ Dropout as identity).
    h = jnp.maximum(
        jnp.dot(h, w2_ref[...], preferred_element_type=jnp.float32)
        + b2_ref[...], 0.0).astype(bf16)
    # Layer 3: Linear(128, 64) + ReLU.
    h = jnp.maximum(
        jnp.dot(h, w3_ref[...], preferred_element_type=jnp.float32)
        + b3_ref[...], 0.0).astype(bf16)
    # Layer 4: Linear(64, 1) as NT dot: (1,64) . (tb,64)^T -> (1, tb).  The
    # contraction is on the last dim of both operands (MXU-native transposed
    # RHS, same dimension numbers as q.k^T in flash attention), so the result
    # is lane-dense and stored as one full row with no transpose copy.
    out_row = jax.lax.dot_general(
        w4_ref[...], h,
        dimension_numbers=(((1,), (1,)), ((), ())),
        preferred_element_type=jnp.float32)
    o_ref[...] = (out_row + b4_ref[...]).astype(o_ref.dtype)


@functools.partial(jax.jit, static_argnames=("block_b",))
def _mlp_forward_impl(x, params, block_b):
    B, D = x.shape
    assert block_b % 128 == 0, "block_b must be a multiple of 128"

    # ---- batch-tile selection -------------------------------------------
    B8 = _round_up(B, 8)
    if B8 <= 1024:
        # Small batch: a single full tile (tb == padded batch, so the output
        # block equals the full last dim and the (8,128) rule is satisfied).
        tb = B8
    else:
        # Large batch: multiple-of-128 tile, capped per-generation, and kept
        # <= ~half the padded batch so grid >= 2 (feeds both v7x TensorCores).
        half = _round_up(pl.cdiv(B8, 2), 128)
        tb = max(128, min(block_b, half))
    B_pad = _round_up(B, tb)

    x = x.astype(jnp.bfloat16)
    if B_pad != B:
        # Padded rows are independent garbage-free zeros; discarded below.
        x = jnp.pad(x, ((0, B_pad - B), (0, 0)))

    grid = (B_pad // tb,)

    def rep(shape):
        # Weights/biases: whole array, constant block index (resident after
        # the first grid step; ~100 KB total, negligible).
        return pl.BlockSpec(shape, lambda i: (0, 0))

    # ~2.7 KB of intermediates per row; only raise the scoped VMEM limit when
    # the tile actually needs the headroom (keeps v7x's 64 MiB physical safe).
    vmem_limit = (48 * 1024 * 1024) if tb > 4096 else (32 * 1024 * 1024)

    out = pl.pallas_call(
        mlp_kernel,
        out_shape=jax.ShapeDtypeStruct((1, B_pad), jnp.float32),
        grid_spec=pltpu.PrefetchScalarGridSpec(
            num_scalar_prefetch=0,
            grid=grid,
            in_specs=[
                pl.BlockSpec((tb, D), lambda i: (i, 0)),    # x tile
                rep((D, H1)), rep((1, H1)),                 # W1, b1
                rep((H1, H2)), rep((1, H2)),                # W2, b2
                rep((H2, H3)), rep((1, H3)),                # W3, b3
                rep((H_OUT, H3)), rep((1, H_OUT)),          # W4 (row form), b4
            ],
            out_specs=pl.BlockSpec((1, tb), lambda i: (0, i)),  # lane-dense row
        ),
        compiler_params=pltpu.CompilerParams(
            dimension_semantics=("parallel",),
            vmem_limit_bytes=vmem_limit),
    )(x,
      params["w1"], params["b1"],
      params["w2"], params["b2"],
      params["w3"], params["b3"],
      params["w4"], params["b4"])

    return out[0, :B].reshape(B, 1)


def mlp_forward(x, params, block_b=None):
    """x: (B, input_dim). params: dict (weights bf16, biases f32).

    Returns (B, 1) float32, matching the PyTorch module in eval mode."""
    if block_b is None:
        block_b = _default_block_b()
    return _mlp_forward_impl(x, params, block_b=block_b)


def init_params(key, input_dim):
    """PyTorch nn.Linear default init: U(-1/sqrt(fan_in), +1/sqrt(fan_in)).

    Layers 1-3 weights stored transposed as (in, out); the final layer weight
    is kept in PyTorch's native (out=1, in=64) row form for the lane-dense
    NT matmul.  Weights are bf16 (MXU inputs), biases f32."""
    dims = [(input_dim, H1), (H1, H2), (H2, H3), (H3, H_OUT)]
    params = {}
    for idx, (fan_in, fan_out) in enumerate(dims, start=1):
        key, kw, kb = jax.random.split(key, 3)
        bound = 1.0 / math.sqrt(fan_in)
        w = jax.random.uniform(kw, (fan_in, fan_out), jnp.float32, -bound, bound)
        b = jax.random.uniform(kb, (1, fan_out), jnp.float32, -bound, bound)
        if idx == 4:
            w = w.T  # (64, 1) -> (1, 64) row form
        params[f"w{idx}"] = w.astype(jnp.bfloat16)
        params[f"b{idx}"] = b
    return params


def mlp_reference(x, params):
    """Pure-JAX forward mirroring the kernel numerics: matmul inputs quantized
    to bf16 (exactly what the MXU sees), accumulation/bias/ReLU in f32.
    Relative to a pure-f32 forward this differs only by bf16 input rounding."""
    f32, bf16 = jnp.float32, jnp.bfloat16

    def q(a):
        return a.astype(bf16).astype(f32)

    h = jnp.maximum(q(x) @ q(params["w1"]) + params["b1"], 0.0)
    h = jnp.maximum(q(h) @ q(params["w2"]) + params["b2"], 0.0)
    h = jnp.maximum(q(h) @ q(params["w3"]) + params["b3"], 0.0)
    return q(h) @ q(params["w4"]).T + params["b4"]


if __name__ == "__main__":
    key = jax.random.PRNGKey(0)
    input_dim = 32
    batch = 8

    k_x, k_p = jax.random.split(key)
    x = jax.random.normal(k_x, (batch, input_dim), jnp.float32)
    params = init_params(k_p, input_dim)

    out = mlp_forward(x, params)
    jax.block_until_ready(out)

    ref = mlp_reference(x, params)
    assert out.shape == (batch, 1), out.shape
    max_err = float(jnp.max(jnp.abs(out - ref)))
    assert jnp.allclose(out, ref, atol=1e-3, rtol=1e-3), f"mismatch: {max_err}"

    print("KERNEL_OK")
</pallas_src>

<mosaic_0001>
module attributes {stable_mosaic.version = 11 : i64} {
  func.func @mlp_kernel(%arg0: i32, %arg1: memref<8x32xbf16, #tpu.memory_space<vmem>>, %arg2: memref<32x256xbf16, #tpu.memory_space<vmem>>, %arg3: memref<1x256xf32, #tpu.memory_space<vmem>>, %arg4: memref<256x128xbf16, #tpu.memory_space<vmem>>, %arg5: memref<1x128xf32, #tpu.memory_space<vmem>>, %arg6: memref<128x64xbf16, #tpu.memory_space<vmem>>, %arg7: memref<1x64xf32, #tpu.memory_space<vmem>>, %arg8: memref<1x64xbf16, #tpu.memory_space<vmem>>, %arg9: memref<1x1xf32, #tpu.memory_space<vmem>>, %arg10: memref<1x8xf32, #tpu.memory_space<vmem>>) attributes {dimension_semantics = [#tpu.dimension_semantics<parallel>], iteration_bounds = array<i64: 1>, scalar_prefetch = 0 : i64, scratch_operands = 0 : i64, tpu.core_type = #tpu.core_type<tc>, window_params = [{transform_indices = @transform_0, window_bounds = array<i64: 8, 32>}, {pipeline_mode = #tpu.pipeline_mode<synchronous>, transform_indices = @transform_1, window_bounds = array<i64: 32, 256>}, {pipeline_mode = #tpu.pipeline_mode<synchronous>, transform_indices = @transform_2, window_bounds = array<i64: 1, 256>}, {pipeline_mode = #tpu.pipeline_mode<synchronous>, transform_indices = @transform_3, window_bounds = array<i64: 256, 128>}, {pipeline_mode = #tpu.pipeline_mode<synchronous>, transform_indices = @transform_4, window_bounds = array<i64: 1, 128>}, {pipeline_mode = #tpu.pipeline_mode<synchronous>, transform_indices = @transform_5, window_bounds = array<i64: 128, 64>}, {pipeline_mode = #tpu.pipeline_mode<synchronous>, transform_indices = @transform_6, window_bounds = array<i64: 1, 64>}, {pipeline_mode = #tpu.pipeline_mode<synchronous>, transform_indices = @transform_7, window_bounds = array<i64: 1, 64>}, {pipeline_mode = #tpu.pipeline_mode<synchronous>, transform_indices = @transform_8, window_bounds = array<i64: 1, 1>}, {transform_indices = @transform_9, window_bounds = array<i64: 1, 8>}]} {
    %c0 = arith.constant 0 : index
    %c0_0 = arith.constant 0 : index
    %0 = vector.load %arg1[%c0, %c0_0] : memref<8x32xbf16, #tpu.memory_space<vmem>>, vector<8x32xbf16>
    %c0_1 = arith.constant 0 : index
    %c0_2 = arith.constant 0 : index
    %1 = vector.load %arg2[%c0_1, %c0_2] : memref<32x256xbf16, #tpu.memory_space<vmem>>, vector<32x256xbf16>
    %cst = arith.constant dense<0.000000e+00> : vector<8x256xf32>
    %2 = tpu.matmul %0, %1, %cst {dimension_numbers = #tpu.dot_dimension_numbers<[1], [0], [0], [1], [0, 0, 1, 1], [], []>} : vector<8x32xbf16>, vector<32x256xbf16>, vector<8x256xf32> -> vector<8x256xf32>
    %c0_3 = arith.constant 0 : index
    %c0_4 = arith.constant 0 : index
    %3 = vector.load %arg3[%c0_3, %c0_4] : memref<1x256xf32, #tpu.memory_space<vmem>>, vector<1x256xf32>
    %4 = vector.broadcast %3 : vector<1x256xf32> to vector<8x256xf32>
    %5 = arith.addf %2, %4 : vector<8x256xf32>
    %cst_5 = arith.constant 0.000000e+00 : f32
    %6 = vector.broadcast %cst_5 : f32 to vector<8x256xf32>
    %7 = arith.maximumf %5, %6 : vector<8x256xf32>
    %8 = arith.truncf %7 : vector<8x256xf32> to vector<8x256xbf16>
    %c0_6 = arith.constant 0 : index
    %c0_7 = arith.constant 0 : index
    %9 = vector.load %arg4[%c0_6, %c0_7] : memref<256x128xbf16, #tpu.memory_space<vmem>>, vector<256x128xbf16>
    %cst_8 = arith.constant dense<0.000000e+00> : vector<8x128xf32>
    %10 = tpu.matmul %8, %9, %cst_8 {dimension_numbers = #tpu.dot_dimension_numbers<[1], [0], [0], [1], [0, 0, 1, 1], [], []>} : vector<8x256xbf16>, vector<256x128xbf16>, vector<8x128xf32> -> vector<8x128xf32>
    %c0_9 = arith.constant 0 : index
    %c0_10 = arith.constant 0 : index
    %11 = vector.load %arg5[%c0_9, %c0_10] : memref<1x128xf32, #tpu.memory_space<vmem>>, vector<1x128xf32>
    %12 = vector.broadcast %11 : vector<1x128xf32> to vector<8x128xf32>
    %13 = arith.addf %10, %12 : vector<8x128xf32>
    %cst_11 = arith.constant 0.000000e+00 : f32
    %14 = vector.broadcast %cst_11 : f32 to vector<8x128xf32>
    %15 = arith.maximumf %13, %14 : vector<8x128xf32>
    %16 = arith.truncf %15 : vector<8x128xf32> to vector<8x128xbf16>
    %c0_12 = arith.constant 0 : index
    %c0_13 = arith.constant 0 : index
    %17 = vector.load %arg6[%c0_12, %c0_13] : memref<128x64xbf16, #tpu.memory_space<vmem>>, vector<128x64xbf16>
    %cst_14 = arith.constant dense<0.000000e+00> : vector<8x64xf32>
    %18 = tpu.matmul %16, %17, %cst_14 {dimension_numbers = #tpu.dot_dimension_numbers<[1], [0], [0], [1], [0, 0, 1, 1], [], []>} : vector<8x128xbf16>, vector<128x64xbf16>, vector<8x64xf32> -> vector<8x64xf32>
    %c0_15 = arith.constant 0 : index
    %c0_16 = arith.constant 0 : index
    %19 = vector.load %arg7[%c0_15, %c0_16] : memref<1x64xf32, #tpu.memory_space<vmem>>, vector<1x64xf32>
    %20 = vector.broadcast %19 : vector<1x64xf32> to vector<8x64xf32>
    %21 = arith.addf %18, %20 : vector<8x64xf32>
    %cst_17 = arith.constant 0.000000e+00 : f32
    %22 = vector.broadcast %cst_17 : f32 to vector<8x64xf32>
    %23 = arith.maximumf %21, %22 : vector<8x64xf32>
    %24 = arith.truncf %23 : vector<8x64xf32> to vector<8x64xbf16>
    %c0_18 = arith.constant 0 : index
    %c0_19 = arith.constant 0 : index
    %25 = vector.load %arg8[%c0_18, %c0_19] : memref<1x64xbf16, #tpu.memory_space<vmem>>, vector<1x64xbf16>
    %cst_20 = arith.constant dense<0.000000e+00> : vector<1x8xf32>
    %26 = tpu.matmul %25, %24, %cst_20 {dimension_numbers = #tpu.dot_dimension_numbers<[1], [1], [0], [0], [0, 0, 1, 0], [], []>} : vector<1x64xbf16>, vector<8x64xbf16>, vector<1x8xf32> -> vector<1x8xf32>
    %c0_21 = arith.constant 0 : index
    %c0_22 = arith.constant 0 : index
    %27 = vector.load %arg9[%c0_21, %c0_22] : memref<1x1xf32, #tpu.memory_space<vmem>>, vector<1x1xf32>
    %28 = vector.broadcast %27 : vector<1x1xf32> to vector<1x8xf32>
    %29 = arith.addf %26, %28 : vector<1x8xf32>
    %c0_23 = arith.constant 0 : index
    %c0_24 = arith.constant 0 : index
    %30 = vector.load %arg10[%c0_23, %c0_24] : memref<1x8xf32, #tpu.memory_space<vmem>>, vector<1x8xf32>
    tpu.vector_store %arg10[%c0_23, %c0_24], %29 {strides = array<i32>} : memref<1x8xf32, #tpu.memory_space<vmem>>, vector<1x8xf32>,
    return
  }
  func.func @transform_0(%arg0: i32) -> (i32, i32) {
    %c0_i32 = arith.constant 0 : i32
    %c0_i32_0 = arith.constant 0 : i32
    return %arg0, %c0_i32 : i32, i32
  }
  func.func @transform_1(%arg0: i32) -> (i32, i32) {
    %c0_i32 = arith.constant 0 : i32
    %c0_i32_0 = arith.constant 0 : i32
    %c0_i32_1 = arith.constant 0 : i32
    return %c0_i32, %c0_i32_0 : i32, i32
  }
  func.func @transform_2(%arg0: i32) -> (i32, i32) {
    %c0_i32 = arith.constant 0 : i32
    %c0_i32_0 = arith.constant 0 : i32
    %c0_i32_1 = arith.constant 0 : i32
    return %c0_i32, %c0_i32_0 : i32, i32
  }
  func.func @transform_3(%arg0: i32) -> (i32, i32) {
    %c0_i32 = arith.constant 0 : i32
    %c0_i32_0 = arith.constant 0 : i32
    %c0_i32_1 = arith.constant 0 : i32
    return %c0_i32, %c0_i32_0 : i32, i32
  }
  func.func @transform_4(%arg0: i32) -> (i32, i32) {
    %c0_i32 = arith.constant 0 : i32
    %c0_i32_0 = arith.constant 0 : i32
    %c0_i32_1 = arith.constant 0 : i32
    return %c0_i32, %c0_i32_0 : i32, i32
  }
  func.func @transform_5(%arg0: i32) -> (i32, i32) {
    %c0_i32 = arith.constant 0 : i32
    %c0_i32_0 = arith.constant 0 : i32
    %c0_i32_1 = arith.constant 0 : i32
    return %c0_i32, %c0_i32_0 : i32, i32
  }
  func.func @transform_6(%arg0: i32) -> (i32, i32) {
    %c0_i32 = arith.constant 0 : i32
    %c0_i32_0 = arith.constant 0 : i32
    %c0_i32_1 = arith.constant 0 : i32
    return %c0_i32, %c0_i32_0 : i32, i32
  }
  func.func @transform_7(%arg0: i32) -> (i32, i32) {
    %c0_i32 = arith.constant 0 : i32
    %c0_i32_0 = arith.constant 0 : i32
    %c0_i32_1 = arith.constant 0 : i32
    return %c0_i32, %c0_i32_0 : i32, i32
  }
  func.func @transform_8(%arg0: i32) -> (i32, i32) {
    %c0_i32 = arith.constant 0 : i32
    %c0_i32_0 = arith.constant 0 : i32
    %c0_i32_1 = arith.constant 0 : i32
    return %c0_i32, %c0_i32_0 : i32, i32
  }
  func.func @transform_9(%arg0: i32) -> (i32, i32) {
    %c0_i32 = arith.constant 0 : i32
    %c0_i32_0 = arith.constant 0 : i32
    return %c0_i32, %arg0 : i32, i32
  }
}

</mosaic_0001>

<llo_original>
// kernel: _mlp_forward_impl.1
$region0: #{_mlp_forward_impl.1}
  #allocation0 [shape = 'u32[]', space=smem, size = 0x4, offset = 0x4, fixed_abs, tag = 'smem constant byte address 0x4 - core index']
  #allocation1 [shape = 'u32[144,128]{1,0:T(1,128)}', space=vmem, size = 0x12000, scoped, tag = 'internal scratch']
  #allocation2 [shape = 'f32[1,1]{1,0:T(1,128)S(1)}', space=vmem, size = 0x200, scoped, tag = 'scoped memory for _mlp_forward_impl.1']
  %s0 = inlined_call_operand.vmem [shape: bf16[8,32], index: 0, kind: input, shape index: {}]
  %s1 = inlined_call_operand.hbm [shape: bf16[32,256], index: 1, kind: input, shape index: {}]
  %s2 = inlined_call_operand.vmem [shape: f32[1,256], index: 2, kind: input, shape index: {}]
  %s3 = inlined_call_operand.vmem [shape: bf16[256,128], index: 3, kind: input, shape index: {}]
  %s4 = inlined_call_operand.hbm [shape: f32[1,128], index: 4, kind: input, shape index: {}]
  %s5 = inlined_call_operand.vmem [shape: bf16[128,64], index: 5, kind: input, shape index: {}]
  %s6 = inlined_call_operand.hbm [shape: f32[1,64], index: 6, kind: input, shape index: {}]
  %s7 = inlined_call_operand.vmem [shape: bf16[1,64], index: 7, kind: input, shape index: {}]
  %s8 = inlined_call_operand.<no memory space> [shape: f32[1,1], index: 8, kind: input, shape index: {}]
  %s9 = inlined_call_operand.hbm [shape: f32[1,8], index: 9, kind: output, shape index: {}]
  %s10 = sld [smem:[#allocation0]]
  $region58: #{_mlp_forward_impl.1} parent=0
    _
  %s12 = ssub.s32 1, %s10
  %s13 = scalar_select 0, %s12, %s10
  %v14 = vstv %s8
  %15 = vst [vmem:[#allocation2] sm:$0x1] %v14
  $region1: #{_mlp_forward_impl.1} parent=0
    #allocation3 [shape = 'u8[16384]{0}', space=vmem, size = 0x4000, scoped, tag = 'input window, operand 1, single buffered']
    #allocation4 [shape = 's32[1]{0}', space=sflag, size = 0x4, scoped, tag = 'scoped memory for _mlp_forward_impl.1']
    #allocation5 [shape = 's32[1]{0}', space=sflag, size = 0x4, scoped, tag = 'scoped memory for _mlp_forward_impl.1']
    #allocation6 [shape = 'u8[512]{0}', space=vmem, size = 0x400, scoped, tag = 'input window, operand 4, single buffered']
    #allocation7 [shape = 's32[1]{0}', space=sflag, size = 0x4, scoped, tag = 'scoped memory for _mlp_forward_impl.1']
    #allocation8 [shape = 'u8[512]{0}', space=vmem, size = 0x400, scoped, tag = 'input window, operand 6, single buffered']
    #allocation9 [shape = 'u8[512]{0}', space=vmem, size = 0x400, scoped, tag = 'output window, operand 0, single buffered']
    %16 = vsyncpa [#allocation4], 0
    %17 = vsyncpa [#allocation7], 0
    %18 = vsyncpa [#allocation5], 0
    // Predicated region
    $region2: #{_mlp_forward_impl.1} parent=1 // pred_check
      _
    $region3: #{_mlp_forward_impl.1} parent=1 // pred_check_branch
      %20 = sbr.rel (0) target = $region5
    $region4: #{_mlp_forward_impl.1} parent=1 // pred_region
      _
    $region5: #{_mlp_forward_impl.1} parent=1 // pred_fallthru
      _
    // Predicated region
    $region6: #{_mlp_forward_impl.1} parent=1 // pred_check
      _
    $region7: #{_mlp_forward_impl.1} parent=1 // pred_check_branch
      %22 = sbr.rel (0) target = $region9
    $region8: #{_mlp_forward_impl.1} parent=1 // pred_region
      %s24 = ssub.s32 512, 512
      %25 = vsyncadd [#allocation4], %s24
      %s26 = sshll.u32 [#allocation3], 4
      %s27 = int_to_ptr.vmem [resolvable:$true] %s26
      %32 = dma.hbm_to_vmem [thread:$0]  %s1, 512, %s27, [#allocation4], 128, 128, 8
    $region9: #{_mlp_forward_impl.1} parent=1 // pred_fallthru
      _
    // Predicated region
    $region10: #{_mlp_forward_impl.1} parent=1 // pred_check
      _
    $region11: #{_mlp_forward_impl.1} parent=1 // pred_check_branch
      %34 = sbr.rel (0) target = $region13
    $region12: #{_mlp_forward_impl.1} parent=1 // pred_region
      _
    $region13: #{_mlp_forward_impl.1} parent=1 // pred_fallthru
      _
    // Predicated region
    $region14: #{_mlp_forward_impl.1} parent=1 // pred_check
      _
    $region15: #{_mlp_forward_impl.1} parent=1 // pred_check_branch
      %36 = sbr.rel (0) target = $region17
    $region16: #{_mlp_forward_impl.1} parent=1 // pred_region
      _
    $region17: #{_mlp_forward_impl.1} parent=1 // pred_fallthru
      _
    // Predicated region
    $region18: #{_mlp_forward_impl.1} parent=1 // pred_check
      _
    $region19: #{_mlp_forward_impl.1} parent=1 // pred_check_branch
      %38 = sbr.rel (0) target = $region21
    $region20: #{_mlp_forward_impl.1} parent=1 // pred_region
      %s40 = ssub.s32 16, 16
      %41 = vsyncadd [#allocation7], %s40
      %s43 = sshll.u32 [#allocation6], 4
      %s44 = int_to_ptr.vmem [resolvable:$true] %s43
      %46 = dma.hbm_to_vmem [thread:$0]  %s4, 16, %s44, [#allocation7]
    $region21: #{_mlp_forward_impl.1} parent=1 // pred_fallthru
      _
    // Predicated region
    $region22: #{_mlp_forward_impl.1} parent=1 // pred_check
      _
    $region23: #{_mlp_forward_impl.1} parent=1 // pred_check_branch
      %48 = sbr.rel (0) target = $region25
    $region24: #{_mlp_forward_impl.1} parent=1 // pred_region
      _
    $region25: #{_mlp_forward_impl.1} parent=1 // pred_fallthru
      _
    // Predicated region
    $region26: #{_mlp_forward_impl.1} parent=1 // pred_check
      _
    $region27: #{_mlp_forward_impl.1} parent=1 // pred_check_branch
      %50 = sbr.rel (0) target = $region29
    $region28: #{_mlp_forward_impl.1} parent=1 // pred_region
      %s52 = ssub.s32 16, 16
      %53 = vsyncadd [#allocation7], %s52
      %s55 = sshll.u32 [#allocation8], 4
      %s56 = int_to_ptr.vmem [resolvable:$true] %s55
      %58 = dma.hbm_to_vmem [thread:$0]  %s6, 16, %s56, [#allocation7]
    $region29: #{_mlp_forward_impl.1} parent=1 // pred_fallthru
      _
    // Predicated region
    $region30: #{_mlp_forward_impl.1} parent=1 // pred_check
      _
    $region31: #{_mlp_forward_impl.1} parent=1 // pred_check_branch
      %60 = sbr.rel (0) target = $region33
    $region32: #{_mlp_forward_impl.1} parent=1 // pred_region
      _
    $region33: #{_mlp_forward_impl.1} parent=1 // pred_fallthru
      _
    // Predicated region
    $region34: #{_mlp_forward_impl.1} parent=1 // pred_check
      _
    $region35: #{_mlp_forward_impl.1} parent=1 // pred_check_branch
      %62 = sbr.rel (0) target = $region37
    $region36: #{_mlp_forward_impl.1} parent=1 // pred_region
      _
    $region37: #{_mlp_forward_impl.1} parent=1 // pred_fallthru
      _
    // Predicated region
    $region38: #{_mlp_forward_impl.1} parent=1 // pred_check
      _
    $region39: #{_mlp_forward_impl.1} parent=1 // pred_check_branch
      %64 = sbr.rel (0) target = $region41
    $region40: #{_mlp_forward_impl.1} parent=1 // pred_region
      %65 = dma.done [#allocation4], 512
    $region41: #{_mlp_forward_impl.1} parent=1 // pred_fallthru
      _
    // Predicated region
    $region42: #{_mlp_forward_impl.1} parent=1 // pred_check
      _
    $region43: #{_mlp_forward_impl.1} parent=1 // pred_check_branch
      %67 = sbr.rel (0) target = $region45
    $region44: #{_mlp_forward_impl.1} parent=1 // pred_region
      %68 = dma.done [#allocation7], 16
    $region45: #{_mlp_forward_impl.1} parent=1 // pred_fallthru
      _
    // Predicated region
    $region46: #{_mlp_forward_impl.1} parent=1 // pred_check
      _
    $region47: #{_mlp_forward_impl.1} parent=1 // pred_check_branch
      %70 = sbr.rel (0) target = $region49
    $region48: #{_mlp_forward_impl.1} parent=1 // pred_region
      %71 = dma.done [#allocation7], 16
    $region49: #{_mlp_forward_impl.1} parent=1 // pred_fallthru
      _
    %v73 = vld [vmem:[%s0] sm:$0xf]
    %v74 = vld [vmem:[#allocation3] sm:$0xff]
    %v75 = vld [vmem:[#allocation3 + $0x8] sm:$0xff]
    %v76 = vld [vmem:[#allocation3 + $0x10] sm:$0xff]
    %v77 = vld [vmem:[#allocation3 + $0x18] sm:$0xff]
    %v78 = vld [vmem:[%s2] sm:$0x3]
    %v80 = vlaneseq
    %v81 = vshrl.u32 %v80, 7
    %v82 = vsub.s32 0, %v81
    %v83 = vrot.slane %v78, %v82
    %v84 = vlaneseq
    %v85 = vshrl.u32 %v84, 7
    %v86 = vsub.s32 1, %v85
    %v87 = vrot.slane %v78, %v86
    %v94 = vunpack.c.l.b16 %v74
    %v95 = vunpack.c.h.b16 %v74
    %v96 = vunpack.c.l.b16 %v75
    %v97 = vunpack.c.h.b16 %v75
    %v98 = vunpack.c.l.b16 %v76
    %v99 = vunpack.c.h.b16 %v76
    %v100 = vunpack.c.l.b16 %v77
    %v101 = vunpack.c.h.b16 %v77
    %v102 = vpack.c.b16 %v96, %v94
    %v103 = vpack.c.b16 %v97, %v95
    %v104 = vpack.c.b16 %v100, %v98
    %v105 = vpack.c.b16 %v101, %v99
    %vm110 = vcmask 261120
    %v112 = vsel %vm110, %v73, 0
    %114 = vmatprep.subr.bf16.mxu0 %v103
    %115 = vmatpush1.bf16.msra.mxu0 %v102
    %116 = vmatprep.subr.bf16.mxu0 %v105
    %117 = vmatpush1.bf16.msra.mxu0 %v104
    %118 = vmatprep.subr.bf16.mxu0 0
    %119 = vmatpush1.bf16.msra.mxu0 0
    %120 = vmatprep.subr.bf16.mxu0 0
    %121 = vmatpush1.bf16.msra.mxu0 0
    %122 = vmatprep.subr.bf16.mxu0 0
    %123 = vmatpush1.bf16.msra.mxu0 0
    %124 = vmatprep.subr.bf16.mxu0 0
    %125 = vmatpush1.bf16.msra.mxu0 0
    %126 = vmatprep.subr.bf16.mxu0 0
    %127 = vmatpush1.bf16.msra.mxu0 0
    %128 = vmatprep.subr.bf16.mxu0 0
    %129 = vmatpush1.bf16.msra.mxu0 0
    %130 = vmatprep.subr.bf16.mxu0 0
    %131 = vmatpush1.bf16.msra.mxu0 0
    %132 = vmatprep.subr.bf16.mxu0 0
    %133 = vmatpush1.bf16.msra.mxu0 0
    %134 = vmatprep.subr.bf16.mxu0 0
    %135 = vmatpush1.bf16.msra.mxu0 0
    %136 = vmatprep.subr.bf16.mxu0 0
    %137 = vmatpush1.bf16.msra.mxu0 0
    %138 = vmatprep.subr.bf16.mxu0 0
    %139 = vmatpush1.bf16.msra.mxu0 0
    %140 = vmatprep.subr.bf16.mxu0 0
    %141 = vmatpush1.bf16.msra.mxu0 0
    %142 = vmatprep.subr.bf16.mxu0 0
    %143 = vmatpush1.bf16.msra.mxu0 0
    %144 = vmatprep.subr.bf16.mxu0 0
    %145 = vmatpush1.bf16.msra.mxu0 0
    %146 = vmatprep.mubr.bf16.mxu0 0
    %147 = vmatmul.mubr.bf16.gmra.mrb[0].mxu0 %v112
    %v148 = vpop.f32.mrb[0].mxu0
    %v149 = vadd.f32 %v83, %v148
    %v150 = vpop.f32.mrb[0].mxu0
    %v151 = vadd.f32 %v87, %v150
    %v152 = vpop.f32.mrb[0].mxu0
    %v153 = vpop.f32.mrb[0].mxu0
    %154 = vdwg.mxu0
    %v155 = vmax.f32 %v149, 0.0
    %v156 = vmax.f32 %v151, 0.0
    %v157 = vpack.c.bf16 %v155, %v155
    %v158 = vpack.c.bf16 %v156, %v156
    %v159 = vld [vmem:[%s3] sm:$0xf]
    %v160 = vld [vmem:[%s3 + $0x4] sm:$0xf]
    %v161 = vld [vmem:[%s3 + $0x8] sm:$0xf]
    %v162 = vld [vmem:[%s3 + $0xc] sm:$0xf]
    %v163 = vld [vmem:[%s3 + $0x10] sm:$0xf]
    %v164 = vld [vmem:[%s3 + $0x14] sm:$0xf]
    %v165 = vld [vmem:[%s3 + $0x18] sm:$0xf]
    %v166 = vld [vmem:[%s3 + $0x1c] sm:$0xf]
    %v167 = vld [vmem:[%s3 + $0x20] sm:$0xf]
    %v168 = vld [vmem:[%s3 + $0x24] sm:$0xf]
    %v169 = vld [vmem:[%s3 + $0x28] sm:$0xf]
    %v170 = vld [vmem:[%s3 + $0x2c] sm:$0xf]
    %v171 = vld [vmem:[%s3 + $0x30] sm:$0xf]
    %v172 = vld [vmem:[%s3 + $0x34] sm:$0xf]
    %v173 = vld [vmem:[%s3 + $0x38] sm:$0xf]
    %v174 = vld [vmem:[%s3 + $0x3c] sm:$0xf]
    %v175 = vld [vmem:[%s3 + $0x40] sm:$0xf]
    %v176 = vld [vmem:[%s3 + $0x44] sm:$0xf]
    %v177 = vld [vmem:[%s3 + $0x48] sm:$0xf]
    %v178 = vld [vmem:[%s3 + $0x4c] sm:$0xf]
    %v179 = vld [vmem:[%s3 + $0x50] sm:$0xf]
    %v180 = vld [vmem:[%s3 + $0x54] sm:$0xf]
    %v181 = vld [vmem:[%s3 + $0x58] sm:$0xf]
    %v182 = vld [vmem:[%s3 + $0x5c] sm:$0xf]
    %v183 = vld [vmem:[%s3 + $0x60] sm:$0xf]
    %v184 = vld [vmem:[%s3 + $0x64] sm:$0xf]
    %v185 = vld [vmem:[%s3 + $0x68] sm:$0xf]
    %v186 = vld [vmem:[%s3 + $0x6c] sm:$0xf]
    %v187 = vld [vmem:[%s3 + $0x70] sm:$0xf]
    %v188 = vld [vmem:[%s3 + $0x74] sm:$0xf]
    %v189 = vld [vmem:[%s3 + $0x78] sm:$0xf]
    %v190 = vld [vmem:[%s3 + $0x7c] sm:$0xf]
    %v191 = vld [vmem:[#allocation6] sm:$0x1]
    %v193 = vlaneseq
    %v194 = vshrl.u32 %v193, 7
    %v195 = vsub.s32 0, %v194
    %v196 = vrot.slane %v191, %v195
    %v230 = vunpack.c.l.b16 %v159
    %v231 = vunpack.c.l.b16 %v160
    %v232 = vunpack.c.l.b16 %v161
    %v233 = vunpack.c.l.b16 %v162
    %v234 = vunpack.c.l.b16 %v163
    %v235 = vunpack.c.l.b16 %v164
    %v236 = vunpack.c.l.b16 %v165
    %v237 = vunpack.c.l.b16 %v166
    %v238 = vunpack.c.l.b16 %v167
    %v239 = vunpack.c.l.b16 %v168
    %v240 = vunpack.c.l.b16 %v169
    %v241 = vunpack.c.l.b16 %v170
    %v242 = vunpack.c.l.b16 %v171
    %v243 = vunpack.c.l.b16 %v172
    %v244 = vunpack.c.l.b16 %v173
    %v245 = vunpack.c.l.b16 %v174
    %v246 = vunpack.c.l.b16 %v175
    %v247 = vunpack.c.l.b16 %v176
    %v248 = vunpack.c.l.b16 %v177
    %v249 = vunpack.c.l.b16 %v178
    %v250 = vunpack.c.l.b16 %v179
    %v251 = vunpack.c.l.b16 %v180
    %v252 = vunpack.c.l.b16 %v181
    %v253 = vunpack.c.l.b16 %v182
    %v254 = vunpack.c.l.b16 %v183
    %v255 = vunpack.c.l.b16 %v184
    %v256 = vunpack.c.l.b16 %v185
    %v257 = vunpack.c.l.b16 %v186
    %v258 = vunpack.c.l.b16 %v187
    %v259 = vunpack.c.l.b16 %v188
    %v260 = vunpack.c.l.b16 %v189
    %v261 = vunpack.c.l.b16 %v190
    %v262 = vpack.c.b16 %v231, %v230
    %v263 = vpack.c.b16 %v233, %v232
    %v264 = vpack.c.b16 %v235, %v234
    %v265 = vpack.c.b16 %v237, %v236
    %v266 = vpack.c.b16 %v239, %v238
    %v267 = vpack.c.b16 %v241, %v240
    %v268 = vpack.c.b16 %v243, %v242
    %v269 = vpack.c.b16 %v245, %v244
    %v270 = vpack.c.b16 %v247, %v246
    %v271 = vpack.c.b16 %v249, %v248
    %v272 = vpack.c.b16 %v251, %v250
    %v273 = vpack.c.b16 %v253, %v252
    %v274 = vpack.c.b16 %v255, %v254
    %v275 = vpack.c.b16 %v257, %v256
    %v276 = vpack.c.b16 %v259, %v258
    %v277 = vpack.c.b16 %v261, %v260
    %294 = vmatprep.subr.bf16.mxu0 0
    %295 = vmatpush1.bf16.msra.mxu0 %v262
    %296 = vmatprep.subr.bf16.mxu0 0
    %297 = vmatpush1.bf16.msra.mxu0 %v263
    %298 = vmatprep.subr.bf16.mxu0 0
    %299 = vmatpush1.bf16.msra.mxu0 %v264
    %300 = vmatprep.subr.bf16.mxu0 0
    %301 = vmatpush1.bf16.msra.mxu0 %v265
    %302 = vmatprep.subr.bf16.mxu0 0
    %303 = vmatpush1.bf16.msra.mxu0 %v266
    %304 = vmatprep.subr.bf16.mxu0 0
    %305 = vmatpush1.bf16.msra.mxu0 %v267
    %306 = vmatprep.subr.bf16.mxu0 0
    %307 = vmatpush1.bf16.msra.mxu0 %v268
    %308 = vmatprep.subr.bf16.mxu0 0
    %309 = vmatpush1.bf16.msra.mxu0 %v269
    %310 = vmatprep.subr.bf16.mxu0 0
    %311 = vmatpush1.bf16.msra.mxu0 %v270
    %312 = vmatprep.subr.bf16.mxu0 0
    %313 = vmatpush1.bf16.msra.mxu0 %v271
    %314 = vmatprep.subr.bf16.mxu0 0
    %315 = vmatpush1.bf16.msra.mxu0 %v272
    %316 = vmatprep.subr.bf16.mxu0 0
    %317 = vmatpush1.bf16.msra.mxu0 %v273
    %318 = vmatprep.subr.bf16.mxu0 0
    %319 = vmatpush1.bf16.msra.mxu0 %v274
    %320 = vmatprep.subr.bf16.mxu0 0
    %321 = vmatpush1.bf16.msra.mxu0 %v275
    %322 = vmatprep.subr.bf16.mxu0 0
    %323 = vmatpush1.bf16.msra.mxu0 %v276
    %324 = vmatprep.subr.bf16.mxu0 0
    %325 = vmatpush1.bf16.msra.mxu0 %v277
    %326 = vmatprep.mubr.bf16.mxu0 %v158
    %327 = vmatmul.mubr.bf16.gmra.mrb[0].mxu0 %v157
    %v328 = vpop.f32.mrb[0].mxu0
    %v329 = vadd.f32 %v196, %v328
    %v330 = vpop.f32.mrb[0].mxu0
    %v331 = vpop.f32.mrb[0].mxu0
    %v332 = vpop.f32.mrb[0].mxu0
    %333 = vdwg.mxu0
    %v334 = vmax.f32 %v329, 0.0
    %v335 = vpack.c.bf16 %v334, %v334
    %v336 = vld [vmem:[%s5] sm:$0xf]
    %v337 = vld [vmem:[%s5 + $0x4] sm:$0xf]
    %v338 = vld [vmem:[%s5 + $0x8] sm:$0xf]
    %v339 = vld [vmem:[%s5 + $0xc] sm:$0xf]
    %v340 = vld [vmem:[%s5 + $0x10] sm:$0xf]
    %v341 = vld [vmem:[%s5 + $0x14] sm:$0xf]
    %v342 = vld [vmem:[%s5 + $0x18] sm:$0xf]
    %v343 = vld [vmem:[%s5 + $0x1c] sm:$0xf]
    %v344 = vld [vmem:[%s5 + $0x20] sm:$0xf]
    %v345 = vld [vmem:[%s5 + $0x24] sm:$0xf]
    %v346 = vld [vmem:[%s5 + $0x28] sm:$0xf]
    %v347 = vld [vmem:[%s5 + $0x2c] sm:$0xf]
    %v348 = vld [vmem:[%s5 + $0x30] sm:$0xf]
    %v349 = vld [vmem:[%s5 + $0x34] sm:$0xf]
    %v350 = vld [vmem:[%s5 + $0x38] sm:$0xf]
    %v351 = vld [vmem:[%s5 + $0x3c] sm:$0xf]
    %v352 = vld [vmem:[#allocation8] sm:$0x1]
    %v354 = vlaneseq
    %v355 = vshrl.u32 %v354, 7
    %v356 = vsub.s32 0, %v355
    %v357 = vrot.slane %v352, %v356
    %v375 = vunpack.c.l.b16 %v336
    %v376 = vunpack.c.l.b16 %v337
    %v377 = vunpack.c.l.b16 %v338
    %v378 = vunpack.c.l.b16 %v339
    %v379 = vunpack.c.l.b16 %v340
    %v380 = vunpack.c.l.b16 %v341
    %v381 = vunpack.c.l.b16 %v342
    %v382 = vunpack.c.l.b16 %v343
    %v383 = vunpack.c.l.b16 %v344
    %v384 = vunpack.c.l.b16 %v345
    %v385 = vunpack.c.l.b16 %v346
    %v386 = vunpack.c.l.b16 %v347
    %v387 = vunpack.c.l.b16 %v348
    %v388 = vunpack.c.l.b16 %v349
    %v389 = vunpack.c.l.b16 %v350
    %v390 = vunpack.c.l.b16 %v351
    %v391 = vpack.c.b16 %v376, %v375
    %v392 = vpack.c.b16 %v378, %v377
    %v393 = vpack.c.b16 %v380, %v379
    %v394 = vpack.c.b16 %v382, %v381
    %v395 = vpack.c.b16 %v384, %v383
    %v396 = vpack.c.b16 %v386, %v385
    %v397 = vpack.c.b16 %v388, %v387
    %v398 = vpack.c.b16 %v390, %v389
    %407 = vmatprep.subr.bf16.mxu0 0
    %408 = vmatpush1.bf16.msra.mxu0 %v391
    %409 = vmatprep.subr.bf16.mxu0 0
    %410 = vmatpush1.bf16.msra.mxu0 %v392
    %411 = vmatprep.subr.bf16.mxu0 0
    %412 = vmatpush1.bf16.msra.mxu0 %v393
    %413 = vmatprep.subr.bf16.mxu0 0
    %414 = vmatpush1.bf16.msra.mxu0 %v394
    %415 = vmatprep.subr.bf16.mxu0 0
    %416 = vmatpush1.bf16.msra.mxu0 %v395
    %417 = vmatprep.subr.bf16.mxu0 0
    %418 = vmatpush1.bf16.msra.mxu0 %v396
    %419 = vmatprep.subr.bf16.mxu0 0
    %420 = vmatpush1.bf16.msra.mxu0 %v397
    %421 = vmatprep.subr.bf16.mxu0 0
    %422 = vmatpush1.bf16.msra.mxu0 %v398
    %423 = vmatprep.subr.bf16.mxu0 0
    %424 = vmatpush1.bf16.msra.mxu0 0
    %425 = vmatprep.subr.bf16.mxu0 0
    %426 = vmatpush1.bf16.msra.mxu0 0
    %427 = vmatprep.subr.bf16.mxu0 0
    %428 = vmatpush1.bf16.msra.mxu0 0
    %429 = vmatprep.subr.bf16.mxu0 0
    %430 = vmatpush1.bf16.msra.mxu0 0
    %431 = vmatprep.subr.bf16.mxu0 0
    %432 = vmatpush1.bf16.msra.mxu0 0
    %433 = vmatprep.subr.bf16.mxu0 0
    %434 = vmatpush1.bf16.msra.mxu0 0
    %435 = vmatprep.subr.bf16.mxu0 0
    %436 = vmatpush1.bf16.msra.mxu0 0
    %437 = vmatprep.subr.bf16.mxu0 0
    %438 = vmatpush1.bf16.msra.mxu0 0
    %439 = vmatprep.mubr.bf16.mxu0 0
    %440 = vmatmul.mubr.bf16.gmra.mrb[0].mxu0 %v335
    %v441 = vpop.f32.mrb[0].mxu0
    %v442 = vadd.f32 %v357, %v441
    %v443 = vpop.f32.mrb[0].mxu0
    %v444 = vpop.f32.mrb[0].mxu0
    %v445 = vpop.f32.mrb[0].mxu0
    %446 = vdwg.mxu0
    %v447 = vmax.f32 %v442, 0.0
    %v448 = vpack.c.bf16 %v447, %v447
    %v449 = vld [vmem:[%s7] sm:$0x1]
    %v450 = vld [vmem:[#allocation2] sm:$0x1]
    %452 = vset.pattern.permute.xlu0 0
    %453 = vperm.xlu0 %452, %v450
    %v454 = vpop.permute.xlu0 %453
    %v456 = vlaneseq
    %v457 = vshrl.u32 %v456, 7
    %v458 = vsub.s32 0, %v457
    %v459 = vrot.slane %v454, %v458
    %vm460 = vcmask 523264
    %v462 = vsel %vm460, %v449, 0
    %v465 = vsel %vm460, %v448, 0
    %467 = vmatprep.subr.bf16.mxu0 0
    %468 = vmatpush1.bf16.xpose.msra.mxu0 %v465
    %469 = vmatprep.subr.bf16.mxu0 0
    %470 = vmatpush1.bf16.xpose.msra.mxu0 0
    %471 = vmatprep.subr.bf16.mxu0 0
    %472 = vmatpush1.bf16.xpose.msra.mxu0 0
    %473 = vmatprep.subr.bf16.mxu0 0
    %474 = vmatpush1.bf16.xpose.msra.mxu0 0
    %475 = vmatprep.subr.bf16.mxu0 0
    %476 = vmatpush1.bf16.xpose.msra.mxu0 0
    %477 = vmatprep.subr.bf16.mxu0 0
    %478 = vmatpush1.bf16.xpose.msra.mxu0 0
    %479 = vmatprep.subr.bf16.mxu0 0
    %480 = vmatpush1.bf16.xpose.msra.mxu0 0
    %481 = vmatprep.subr.bf16.mxu0 0
    %482 = vmatpush1.bf16.xpose.msra.mxu0 0
    %483 = vmatprep.subr.bf16.mxu0 0
    %484 = vmatpush1.bf16.xpose.msra.mxu0 0
    %485 = vmatprep.subr.bf16.mxu0 0
    %486 = vmatpush1.bf16.xpose.msra.mxu0 0
    %487 = vmatprep.subr.bf16.mxu0 0
    %488 = vmatpush1.bf16.xpose.msra.mxu0 0
    %489 = vmatprep.subr.bf16.mxu0 0
    %490 = vmatpush1.bf16.xpose.msra.mxu0 0
    %491 = vmatprep.subr.bf16.mxu0 0
    %492 = vmatpush1.bf16.xpose.msra.mxu0 0
    %493 = vmatprep.subr.bf16.mxu0 0
    %494 = vmatpush1.bf16.xpose.msra.mxu0 0
    %495 = vmatprep.subr.bf16.mxu0 0
    %496 = vmatpush1.bf16.xpose.msra.mxu0 0
    %497 = vmatprep.subr.bf16.mxu0 0
    %498 = vmatpush1.bf16.xpose.msra.mxu0 0
    %499 = vmatprep.mubr.bf16.mxu0 0
    %500 = vmatmul.mubr.bf16.gmra.mrb[0].mxu0 %v462
    %v501 = vpop.f32.mrb[0].mxu0
    %v502 = vadd.f32 %v459, %v501
    %v503 = vpop.f32.mrb[0].mxu0
    %v504 = vpop.f32.mrb[0].mxu0
    %v505 = vpop.f32.mrb[0].mxu0
    %506 = vdwg.mxu0
    %vm507 = vcmask 57344
    %508 = vst.msk [vmem:[#allocation9] sm:$0x1] %vm507, %v502
    // Predicated region
    $region50: #{_mlp_forward_impl.1} parent=1 // pred_check
      _
    $region51: #{_mlp_forward_impl.1} parent=1 // pred_check_branch
      %510 = sbr.rel (0) target = $region53
    $region52: #{_mlp_forward_impl.1} parent=1 // pred_region
      %s512 = ssub.s32 16, 16
      %513 = vsyncadd [#allocation5], %s512
      %s515 = sshll.u32 [#allocation9], 4
      %s516 = int_to_ptr.vmem [resolvable:$true] %s515
      %518 = dma.vmem_to_hbm [thread:$0]  %s516, 16, %s9, [#allocation5]
    $region53: #{_mlp_forward_impl.1} parent=1 // pred_fallthru
      _
    // Predicated region
    $region54: #{_mlp_forward_impl.1} parent=1 // pred_check
      _
    $region55: #{_mlp_forward_impl.1} parent=1 // pred_check_branch
      %520 = sbr.rel (0) target = $region57
    $region56: #{_mlp_forward_impl.1} parent=1 // pred_region
      %521 = dma.done [#allocation5], 16
    $region57: #{_mlp_forward_impl.1} parent=1 // pred_fallthru
      _
    %522 = vsyncpa [#allocation4], 1
    %523 = vsyncpa [#allocation7], 1
    %524 = vsyncpa [#allocation5], 1

</llo_original>
